<compile_context>
chip_gen: v6e
topology: v6e:2x2x1
jax: 0.10.0
libtpu: 0.0.40
codegen_flags: <defaults>
</compile_context>

<pallas_src>
import functools
import numpy as np
import jax
import jax.numpy as jnp
from jax.experimental import pallas as pl
from jax.experimental.pallas import tpu as pltpu

_SUBLANE = 8


def _round_up(x, m):
    return ((x + m - 1) // m) * m


def _choose_tile_r(max_rows, out_dim, budget_bytes=32 * 1024 * 1024):
    # VMEM per row of tile: teacher + student inputs double-buffered (2 * 2) plus the
    # teacher-probs scratch (1)  =>  ~5 * TILE_R * D * 4 bytes.  Stay well under the
    # v7x 64 MiB physical VMEM; cap at 512 rows (diminishing HBM-roofline returns).
    per_row = 5 * out_dim * 4
    cap = max(_SUBLANE, (budget_bytes // per_row) // _SUBLANE * _SUBLANE)
    cap = min(cap, 512)
    return int(max(_SUBLANE, min(cap, _round_up(max_rows, _SUBLANE))))


def _ce_kernel(tblk_ref, sblk_ref, valid_ref, first_ref, cidx_ref,   # scalar prefetch (SMEM)
               scale_ref, center_ref, t_ref, s_ref,                   # inputs
               out_ref,                                               # output (SMEM, whole)
               probs_ref):                                            # VMEM scratch (TILE_R, D)
    p = pl.program_id(0)
    inv_teacher_temp = scale_ref[0]
    inv_student_temp = scale_ref[1]

    # Teacher softmax once per (teacher chunk, row tile); cached in VMEM scratch and
    # reused by every consecutive student step for this teacher block (the teacher
    # block index does not change across those steps, so its DMA is skipped too).
    @pl.when(first_ref[p] == 1)
    def _():
        t = (t_ref[...] - center_ref[0]) * inv_teacher_temp
        t = t - jnp.max(t, axis=-1, keepdims=True)
        t_exp = jnp.exp(t)
        inv_den = pl.reciprocal(jnp.sum(t_exp, axis=-1, keepdims=True))  # exact
        probs_ref[...] = t_exp * inv_den

    # Student: CE = lse(s_shifted) - sum(probs * s_shifted)  (valid since sum(probs)=1),
    # avoiding the full (R, D) log_q temporary.
    s = s_ref[...] * inv_student_temp
    s = s - jnp.max(s, axis=-1, keepdims=True)
    lse = jnp.log(jnp.sum(jnp.exp(s), axis=-1, keepdims=True))            # (TILE_R, 1)
    ce = lse - jnp.sum(probs_ref[...] * s, axis=-1, keepdims=True)        # (TILE_R, 1)

    # Mask rows beyond the true chunk length (row-tile padding).
    row_id = jax.lax.broadcasted_iota(jnp.int32, ce.shape, 0)
    ce = jnp.where(row_id < valid_ref[p], ce, 0.0)
    out_ref[p] = jnp.sum(ce)


@functools.partial(jax.jit, static_argnames=("ncrops", "tile_r"))
def _forward_impl(student_output, teacher_output, s_output, t_output,
                  center, center2, scales, center_momentum, *, ncrops, tile_r):
    D = student_output.shape[-1]
    r_cls = teacher_output.shape[0] // 2            # rows per CLS chunk
    Bt, N, _ = t_output.shape
    half = Bt // 2
    r_patch = half * N                              # rows per patch chunk

    def pad_rows(x2d):
        pad = (-x2d.shape[0]) % tile_r
        return jnp.pad(x2d, ((0, pad), (0, 0))) if pad else x2d

    t_cls = teacher_output.reshape(2, r_cls, D)
    s_cls = student_output.reshape(ncrops, student_output.shape[0] // ncrops, D)
    t_pat = t_output.reshape(2, r_patch, D)
    s_pat = s_output.reshape(2, r_patch, D)

    teacher_bank = jnp.concatenate(
        [pad_rows(t_cls[i]) for i in range(2)] +
        [pad_rows(t_pat[i]) for i in range(2)], axis=0)
    student_bank = jnp.concatenate(
        [pad_rows(s_cls[v]) for v in range(ncrops)] +
        [pad_rows(s_pat[i]) for i in range(2)], axis=0)
    center_bank = jnp.concatenate(
        [center.reshape(1, 1, D), center2.reshape(1, 1, D)], axis=0)

    # ---- static work list (one step per (teacher tile, student tile) pairing) ----
    n_tiles_cls = _round_up(r_cls, tile_r) // tile_r
    n_tiles_pat = _round_up(r_patch, tile_r) // tile_r
    tblk, sblk, valid, first, cidx = [], [], [], [], []
    for iq in range(2):                                   # CLS: every v != iq
        for r in range(n_tiles_cls):
            for j, v in enumerate([v for v in range(ncrops) if v != iq]):
                tblk.append(iq * n_tiles_cls + r)
                sblk.append(v * n_tiles_cls + r)
                valid.append(min(tile_r, r_cls - r * tile_r))
                first.append(1 if j == 0 else 0)
                cidx.append(0)
    n_cls_steps = len(tblk)
    for iq in range(2):                                   # patch: matched pairs only
        for r in range(n_tiles_pat):
            tblk.append(2 * n_tiles_cls + iq * n_tiles_pat + r)
            sblk.append(ncrops * n_tiles_cls + iq * n_tiles_pat + r)
            valid.append(min(tile_r, r_patch - r * tile_r))
            first.append(1)
            cidx.append(1)
    n_steps = len(tblk)

    tblk = jnp.asarray(tblk, jnp.int32)
    sblk = jnp.asarray(sblk, jnp.int32)
    valid = jnp.asarray(valid, jnp.int32)
    first = jnp.asarray(first, jnp.int32)
    cidx = jnp.asarray(cidx, jnp.int32)

    grid_spec = pltpu.PrefetchScalarGridSpec(
        num_scalar_prefetch=5,
        grid=(n_steps,),
        in_specs=[
            pl.BlockSpec(memory_space=pltpu.MemorySpace.SMEM),                         # scales
            pl.BlockSpec((1, 1, D), lambda p, tb, sb, vr, fr, ci: (ci[p], 0, 0)),      # center
            pl.BlockSpec((tile_r, D), lambda p, tb, sb, vr, fr, ci: (tb[p], 0)),       # teacher
            pl.BlockSpec((tile_r, D), lambda p, tb, sb, vr, fr, ci: (sb[p], 0)),       # student
        ],
        out_specs=pl.BlockSpec(memory_space=pltpu.MemorySpace.SMEM),
        scratch_shapes=[pltpu.VMEM((tile_r, D), jnp.float32)],                          # cached probs
    )
    step_sums = pl.pallas_call(
        _ce_kernel,
        out_shape=jax.ShapeDtypeStruct((n_steps,), jnp.float32),
        grid_spec=grid_spec,
        compiler_params=pltpu.CompilerParams(
            # Sequential grid required: teacher-probs cache + is_first gating rely on order.
            dimension_semantics=("arbitrary",),
            vmem_limit_bytes=48 * 1024 * 1024,
        ),
    )(tblk, sblk, valid, first, cidx, scales, center_bank, teacher_bank, student_bank)

    n_cls_pairs = 2 * (ncrops - 1)
    total_loss = jnp.sum(step_sums[:n_cls_steps]) / (n_cls_pairs * r_cls)
    total_loss2 = jnp.sum(step_sums[n_cls_steps:]) / (2 * r_patch)

    # ---- EMA center update (same as torch update_center, single device) ----
    m = center_momentum
    batch_center = jnp.sum(teacher_output, axis=0, keepdims=True) / teacher_output.shape[0]
    new_center = center * m + batch_center * (1.0 - m)
    batch_center2 = jnp.sum(t_output, axis=(0, 1), keepdims=True) / (Bt * N)
    new_center2 = center2 * m + batch_center2 * (1.0 - m)
    return total_loss, total_loss2, new_center, new_center2


class CLSPatchLossPallas:
    def __init__(self, out_dim, ncrops, warmup_teacher_temp, teacher_temp,
                 warmup_teacher_temp_epochs, nepochs,
                 student_temp=0.1, center_momentum=0.9):
        self.student_temp = student_temp
        self.center_momentum = center_momentum
        self.ncrops = ncrops
        self.center = jnp.zeros((1, out_dim), jnp.float32)
        self.center2 = jnp.zeros((1, 1, out_dim), jnp.float32)
        self.teacher_temp_schedule = np.concatenate((
            np.linspace(warmup_teacher_temp, teacher_temp, warmup_teacher_temp_epochs),
            np.ones(nepochs - warmup_teacher_temp_epochs) * teacher_temp))

    def forward(self, student_output, teacher_output, s_output, t_output, epoch):
        temp = float(self.teacher_temp_schedule[epoch])
        scales = jnp.array([1.0 / temp, 1.0 / self.student_temp], jnp.float32)
        D = student_output.shape[-1]
        r_cls = teacher_output.shape[0] // 2
        r_patch = (t_output.shape[0] // 2) * t_output.shape[1]
        tile_r = _choose_tile_r(max(r_cls, r_patch), D)
        loss, loss2, new_center, new_center2 = _forward_impl(
            student_output, teacher_output, s_output, t_output,
            self.center, self.center2, scales, self.center_momentum,
            ncrops=self.ncrops, tile_r=tile_r)
        # TODO(synk): dist.all_reduce of the batch centers omitted (single device, world_size == 1).
        self.center = new_center
        self.center2 = new_center2
        return loss, loss2


def reference_forward(student_output, teacher_output, s_output, t_output,
                      center, center2, temp, student_temp, ncrops):
    student_chunks = jnp.split(student_output / student_temp, ncrops, axis=0)
    teacher_chunks = jnp.split(jax.nn.softmax((teacher_output - center) / temp, axis=-1), 2, axis=0)
    s_chunks = jnp.split(s_output / student_temp, 2, axis=0)
    t_chunks = jnp.split(jax.nn.softmax((t_output - center2) / temp, axis=-1), 2, axis=0)
    total_loss = 0.0
    n_terms = 0
    total_loss2 = 0.0
    n_terms2 = 0
    for iq, q in enumerate(teacher_chunks):
        for v in range(len(student_chunks)):
            if v == iq:
                d = jnp.sum(-t_chunks[iq] * jax.nn.log_softmax(s_chunks[v], axis=-1), axis=-1)
                total_loss2 = total_loss2 + d.mean()
                n_terms2 += 1
                continue
            l = jnp.sum(-q * jax.nn.log_softmax(student_chunks[v], axis=-1), axis=-1)
            total_loss = total_loss + l.mean()
            n_terms += 1
    return total_loss / n_terms, total_loss2 / n_terms2


if __name__ == "__main__":
    key = jax.random.PRNGKey(0)
    out_dim = 256
    ncrops = 4
    B = 8          # batch per crop
    N = 8          # patch tokens

    k1, k2, k3, k4 = jax.random.split(key, 4)
    student_output = jax.random.normal(k1, (ncrops * B, out_dim), jnp.float32)
    teacher_output = jax.random.normal(k2, (2 * B, out_dim), jnp.float32)
    s_output = jax.random.normal(k3, (2 * B, N, out_dim), jnp.float32)
    t_output = jax.random.normal(k4, (2 * B, N, out_dim), jnp.float32)

    loss_mod = CLSPatchLossPallas(out_dim=out_dim, ncrops=ncrops,
                                  warmup_teacher_temp=0.04, teacher_temp=0.07,
                                  warmup_teacher_temp_epochs=3, nepochs=10)

    # First call (zero centers, as at torch __init__) also makes the centers
    # non-zero via the EMA update so the second call exercises centering.
    l1, l2 = loss_mod.forward(student_output, teacher_output, s_output, t_output, epoch=1)
    jax.block_until_ready((l1, l2))

    center_before = loss_mod.center
    center2_before = loss_mod.center2
    l1b, l2b = loss_mod.forward(student_output, teacher_output, s_output, t_output, epoch=2)
    jax.block_until_ready((l1b, l2b))

    ref1, ref2 = reference_forward(
        student_output, teacher_output, s_output, t_output,
        center_before, center2_before,
        temp=float(loss_mod.teacher_temp_schedule[2]),
        student_temp=loss_mod.student_temp, ncrops=ncrops)

    assert np.allclose(np.asarray(l1b), np.asarray(ref1), rtol=1e-4, atol=1e-5), (l1b, ref1)
    assert np.allclose(np.asarray(l2b), np.asarray(ref2), rtol=1e-4, atol=1e-5), (l2b, ref2)
    print("KERNEL_OK")
</pallas_src>

<mosaic_0001>
module attributes {stable_mosaic.version = 11 : i64} {
  func.func @_ce_kernel(%arg0: i32, %arg1: memref<8xi32, #tpu.memory_space<smem>>, %arg2: memref<8xi32, #tpu.memory_space<smem>>, %arg3: memref<8xi32, #tpu.memory_space<smem>>, %arg4: memref<8xi32, #tpu.memory_space<smem>>, %arg5: memref<8xi32, #tpu.memory_space<smem>>, %arg6: memref<2xf32, #tpu.memory_space<smem>>, %arg7: memref<1x1x256xf32, #tpu.memory_space<vmem>>, %arg8: memref<64x256xf32, #tpu.memory_space<vmem>>, %arg9: memref<64x256xf32, #tpu.memory_space<vmem>>, %arg10: memref<8xf32, #tpu.memory_space<smem>>, %arg11: memref<64x256xf32, #tpu.memory_space<vmem>>) attributes {dimension_semantics = [#tpu.dimension_semantics<arbitrary>], iteration_bounds = array<i64: 8>, scalar_prefetch = 5 : i64, scratch_operands = 1 : i64, tpu.core_type = #tpu.core_type<tc>, window_params = [{transform_indices = @transform_0, window_bounds = array<i64: 2>}, {transform_indices = @transform_1, window_bounds = array<i64: 1, 1, 256>}, {transform_indices = @transform_2, window_bounds = array<i64: 64, 256>}, {transform_indices = @transform_3, window_bounds = array<i64: 64, 256>}, {transform_indices = @transform_4, window_bounds = array<i64: 8>}]} {
    %c0 = arith.constant 0 : index
    %0 = memref.load %arg6[%c0] : memref<2xf32, #tpu.memory_space<smem>>
    %c1 = arith.constant 1 : index
    %1 = memref.load %arg6[%c1] : memref<2xf32, #tpu.memory_space<smem>>
    %2 = arith.index_cast %arg0 : i32 to index
    %3 = memref.load %arg4[%2] : memref<8xi32, #tpu.memory_space<smem>>
    %c1_i32 = arith.constant 1 : i32
    %4 = arith.cmpi eq, %3, %c1_i32 : i32
    %5 = arith.extui %4 : i1 to i32
    %c0_i32 = arith.constant 0 : i32
    %6 = arith.cmpi ne, %5, %c0_i32 : i32
    scf.if %6 {
      %c0_8 = arith.constant 0 : index
      %c0_9 = arith.constant 0 : index
      %36 = vector.load %arg8[%c0_8, %c0_9] : memref<64x256xf32, #tpu.memory_space<vmem>>, vector<64x256xf32>
      %c0_10 = arith.constant 0 : index
      %c0_11 = arith.constant 0 : index
      %c0_12 = arith.constant 0 : index
      %37 = vector.load %arg7[%c0_10, %c0_11, %c0_12] : memref<1x1x256xf32, #tpu.memory_space<vmem>>, vector<1x1x256xf32>
      %38 = vector.shape_cast %37 : vector<1x1x256xf32> to vector<1x256xf32>
      %39 = vector.broadcast %38 : vector<1x256xf32> to vector<64x256xf32>
      %40 = arith.subf %36, %39 : vector<64x256xf32>
      %41 = vector.broadcast %0 : f32 to vector<64x256xf32>
      %42 = arith.mulf %40, %41 : vector<64x256xf32>
      %cst_13 = arith.constant dense<0xFF800000> : vector<64xf32>
      %43 = vector.multi_reduction <maximumf>, %42, %cst_13 [1] : vector<64x256xf32> to vector<64xf32>
      %44 = vector.shape_cast %43 : vector<64xf32> to vector<64x1xf32>
      %45 = vector.broadcast %44 : vector<64x1xf32> to vector<64x256xf32>
      %46 = arith.subf %42, %45 : vector<64x256xf32>
      %47 = math.exp %46 : vector<64x256xf32>
      %cst_14 = arith.constant dense<0.000000e+00> : vector<64xf32>
      %48 = vector.multi_reduction <add>, %47, %cst_14 [1] : vector<64x256xf32> to vector<64xf32>
      %49 = vector.shape_cast %48 : vector<64xf32> to vector<64x1xf32>
      %50 = tpu.reciprocal %49 : vector<64x1xf32> -> vector<64x1xf32>
      %51 = vector.broadcast %50 : vector<64x1xf32> to vector<64x256xf32>
      %52 = arith.mulf %47, %51 : vector<64x256xf32>
      %c0_15 = arith.constant 0 : index
      %c0_16 = arith.constant 0 : index
      %53 = vector.load %arg11[%c0_15, %c0_16] : memref<64x256xf32, #tpu.memory_space<vmem>>, vector<64x256xf32>
      tpu.vector_store %arg11[%c0_15, %c0_16], %52 {strides = array<i32>} : memref<64x256xf32, #tpu.memory_space<vmem>>, vector<64x256xf32>,
    } else {
    }
    %c0_0 = arith.constant 0 : index
    %c0_1 = arith.constant 0 : index
    %7 = vector.load %arg9[%c0_0, %c0_1] : memref<64x256xf32, #tpu.memory_space<vmem>>, vector<64x256xf32>
    %8 = vector.broadcast %1 : f32 to vector<64x256xf32>
    %9 = arith.mulf %7, %8 : vector<64x256xf32>
    %cst = arith.constant dense<0xFF800000> : vector<64xf32>
    %10 = vector.multi_reduction <maximumf>, %9, %cst [1] : vector<64x256xf32> to vector<64xf32>
    %11 = vector.shape_cast %10 : vector<64xf32> to vector<64x1xf32>
    %12 = vector.broadcast %11 : vector<64x1xf32> to vector<64x256xf32>
    %13 = arith.subf %9, %12 : vector<64x256xf32>
    %14 = math.exp %13 : vector<64x256xf32>
    %cst_2 = arith.constant dense<0.000000e+00> : vector<64xf32>
    %15 = vector.multi_reduction <add>, %14, %cst_2 [1] : vector<64x256xf32> to vector<64xf32>
    %16 = vector.shape_cast %15 : vector<64xf32> to vector<64x1xf32>
    %17 = math.log %16 : vector<64x1xf32>
    %c0_3 = arith.constant 0 : index
    %c0_4 = arith.constant 0 : index
    %18 = vector.load %arg11[%c0_3, %c0_4] : memref<64x256xf32, #tpu.memory_space<vmem>>, vector<64x256xf32>
    %19 = arith.mulf %18, %13 : vector<64x256xf32>
    %cst_5 = arith.constant dense<0.000000e+00> : vector<64xf32>
    %20 = vector.multi_reduction <add>, %19, %cst_5 [1] : vector<64x256xf32> to vector<64xf32>
    %21 = vector.shape_cast %20 : vector<64xf32> to vector<64x1xf32>
    %22 = arith.subf %17, %21 : vector<64x1xf32>
    %23 = tpu.iota {dimensions = array<i32: 0>} : vector<64x1xi32>
    %24 = arith.index_cast %arg0 : i32 to index
    %25 = memref.load %arg3[%24] : memref<8xi32, #tpu.memory_space<smem>>
    %26 = vector.broadcast %25 : i32 to vector<64x1xi32>
    %27 = arith.cmpi slt, %23, %26 : vector<64x1xi32>
    %cst_6 = arith.constant 0.000000e+00 : f32
    %28 = vector.broadcast %cst_6 : f32 to vector<64x1xf32>
    %29 = arith.select %27, %22, %28 : vector<64x1xi1>, vector<64x1xf32>
    %30 = vector.shape_cast %29 : vector<64x1xf32> to vector<1x64x1xf32>
    %cst_7 = arith.constant dense<0.000000e+00> : vector<1xf32>
    %31 = vector.multi_reduction <add>, %30, %cst_7 [1, 2] : vector<1x64x1xf32> to vector<1xf32>
    %32 = vector.shape_cast %31 : vector<1xf32> to vector<1x1x1xf32>
    %33 = vector.extract %32[0, 0, 0] : f32 from vector<1x1x1xf32>
    %34 = arith.index_cast %arg0 : i32 to index
    %35 = memref.load %arg10[%34] : memref<8xf32, #tpu.memory_space<smem>>
    memref.store %33, %arg10[%34] : memref<8xf32, #tpu.memory_space<smem>>
    return
  }
  func.func @transform_0(%arg0: i32, %arg1: memref<8xi32, #tpu.memory_space<smem>>, %arg2: memref<8xi32, #tpu.memory_space<smem>>, %arg3: memref<8xi32, #tpu.memory_space<smem>>, %arg4: memref<8xi32, #tpu.memory_space<smem>>, %arg5: memref<8xi32, #tpu.memory_space<smem>>) -> i32 {
    %c0_i32 = arith.constant 0 : i32
    %c0_i32_0 = arith.constant 0 : i32
    return %c0_i32 : i32
  }
  func.func @transform_1(%arg0: i32, %arg1: memref<8xi32, #tpu.memory_space<smem>>, %arg2: memref<8xi32, #tpu.memory_space<smem>>, %arg3: memref<8xi32, #tpu.memory_space<smem>>, %arg4: memref<8xi32, #tpu.memory_space<smem>>, %arg5: memref<8xi32, #tpu.memory_space<smem>>) -> (i32, i32, i32) {
    %0 = arith.index_cast %arg0 : i32 to index
    %1 = memref.load %arg5[%0] : memref<8xi32, #tpu.memory_space<smem>>
    %c0_i32 = arith.constant 0 : i32
    %c0_i32_0 = arith.constant 0 : i32
    %c0_i32_1 = arith.constant 0 : i32
    return %1, %c0_i32, %c0_i32_0 : i32, i32, i32
  }
  func.func @transform_2(%arg0: i32, %arg1: memref<8xi32, #tpu.memory_space<smem>>, %arg2: memref<8xi32, #tpu.memory_space<smem>>, %arg3: memref<8xi32, #tpu.memory_space<smem>>, %arg4: memref<8xi32, #tpu.memory_space<smem>>, %arg5: memref<8xi32, #tpu.memory_space<smem>>) -> (i32, i32) {
    %0 = arith.index_cast %arg0 : i32 to index
    %1 = memref.load %arg1[%0] : memref<8xi32, #tpu.memory_space<smem>>
    %c0_i32 = arith.constant 0 : i32
    %c0_i32_0 = arith.constant 0 : i32
    return %1, %c0_i32 : i32, i32
  }
  func.func @transform_3(%arg0: i32, %arg1: memref<8xi32, #tpu.memory_space<smem>>, %arg2: memref<8xi32, #tpu.memory_space<smem>>, %arg3: memref<8xi32, #tpu.memory_space<smem>>, %arg4: memref<8xi32, #tpu.memory_space<smem>>, %arg5: memref<8xi32, #tpu.memory_space<smem>>) -> (i32, i32) {
    %0 = arith.index_cast %arg0 : i32 to index
    %1 = memref.load %arg2[%0] : memref<8xi32, #tpu.memory_space<smem>>
    %c0_i32 = arith.constant 0 : i32
    %c0_i32_0 = arith.constant 0 : i32
    return %1, %c0_i32 : i32, i32
  }
  func.func @transform_4(%arg0: i32, %arg1: memref<8xi32, #tpu.memory_space<smem>>, %arg2: memref<8xi32, #tpu.memory_space<smem>>, %arg3: memref<8xi32, #tpu.memory_space<smem>>, %arg4: memref<8xi32, #tpu.memory_space<smem>>, %arg5: memref<8xi32, #tpu.memory_space<smem>>) -> i32 {
    %c0_i32 = arith.constant 0 : i32
    %c0_i32_0 = arith.constant 0 : i32
    return %c0_i32 : i32
  }
}

</mosaic_0001>

<llo_original>
// kernel: _forward_impl.1
$region0: #{_forward_impl.1}
  #allocation0 [shape = 'u32[]', space=smem, size = 0x4, offset = 0x4, fixed_abs, tag = 'smem constant byte address 0x4 - core index']
  #allocation1 [shape = 'u32[144,128]{1,0:T(1,128)}', space=vmem, size = 0x12000, scoped, tag = 'internal scratch']
  #allocation2 [shape = 'f32[64,256]{1,0:T(8,128)}', space=vmem, size = 0x10000, scoped, tag = 'scratch operand']
  #allocation3 [shape = 's32[1]{0}', space=sflag, size = 0x4, scoped, tag = 'scoped memory for _forward_impl.1']
  #allocation4 [shape = 'u8[512]{0}', space=smem, size = 0x200, scoped, tag = 'prefetched SMEM operand 0']
  #allocation5 [shape = 'u8[512]{0}', space=smem, size = 0x200, scoped, tag = 'prefetched SMEM operand 1']
  #allocation6 [shape = 'u8[512]{0}', space=smem, size = 0x200, scoped, tag = 'prefetched SMEM operand 2']
  #allocation7 [shape = 'u8[512]{0}', space=smem, size = 0x200, scoped, tag = 'prefetched SMEM operand 3']
  #allocation8 [shape = 'u8[512]{0}', space=smem, size = 0x200, scoped, tag = 'prefetched SMEM operand 4']
  %s0 = inlined_call_operand.vmem [shape: s32[8], index: 0, kind: input, shape index: {}]
  %s1 = inlined_call_operand.vmem [shape: s32[8], index: 1, kind: input, shape index: {}]
  %s2 = inlined_call_operand.vmem [shape: s32[8], index: 2, kind: input, shape index: {}]
  %s3 = inlined_call_operand.vmem [shape: s32[8], index: 3, kind: input, shape index: {}]
  %s4 = inlined_call_operand.vmem [shape: s32[8], index: 4, kind: input, shape index: {}]
  %s5 = inlined_call_operand.vmem [shape: f32[2], index: 5, kind: input, shape index: {}]
  %s6 = inlined_call_operand.vmem [shape: f32[2,1,256], index: 6, kind: input, shape index: {}]
  %s7 = inlined_call_operand.vmem [shape: f32[256,256], index: 7, kind: input, shape index: {}]
  %s8 = inlined_call_operand.vmem [shape: f32[384,256], index: 8, kind: input, shape index: {}]
  %s9 = inlined_call_operand.vmem [shape: f32[8], index: 9, kind: output, shape index: {}]
  %s10 = sld [smem:[#allocation0]]
  $region57: #{_forward_impl.1} parent=0
    _
  %s12 = ssub.s32 1, %s10
  %s13 = scalar_select 0, %s12, %s10
  %s14 = sshll.u32 %s0, 4
  %s15 = int_to_ptr.vmem [resolvable:$true] %s14
  %17 = dma.vmem_to_smem %s15, 16, [#allocation4], [#allocation3]
  %s18 = sshll.u32 %s1, 4
  %s19 = int_to_ptr.vmem [resolvable:$true] %s18
  %21 = dma.vmem_to_smem %s19, 16, [#allocation5], [#allocation3]
  %s22 = sshll.u32 %s2, 4
  %s23 = int_to_ptr.vmem [resolvable:$true] %s22
  %25 = dma.vmem_to_smem %s23, 16, [#allocation6], [#allocation3]
  %s26 = sshll.u32 %s3, 4
  %s27 = int_to_ptr.vmem [resolvable:$true] %s26
  %29 = dma.vmem_to_smem %s27, 16, [#allocation7], [#allocation3]
  %s30 = sshll.u32 %s4, 4
  %s31 = int_to_ptr.vmem [resolvable:$true] %s30
  %33 = dma.vmem_to_smem %s31, 16, [#allocation8], [#allocation3]
  %34 = dma.done [#allocation3], 80
  %35 = sfence
  $region1: #{_forward_impl.1} parent=0
    #allocation9 [shape = 'u8[512]{0}', space=smem, size = 0x200, scoped, tag = 'input window, operand 5, single buffered']
    #allocation10 [shape = 's32[2]{0}', space=sflag, size = 0x8, scoped, tag = 'scoped memory for _forward_impl.1']
    #allocation11 [shape = 's32[2]{0}', space=sflag, size = 0x8, scoped, tag = 'scoped memory for _forward_impl.1']
    #allocation12 [shape = 'u8[512]{0}', space=smem, size = 0x200, scoped, tag = 'output window, operand 0, single buffered']
    %36 = vsyncpa [#allocation10], 0
    %37 = vsyncpa [#allocation11], 0
    loop: start=0, step=1, limit=10
    $region2: #{_forward_impl.1} parent=1 // loop_pre_header
      _
    $region3: #{_forward_impl.1} parent=1 // loop_header
      %s39 = sphi 0, %s43
      %p40 = scmp.ge.s32.totalorder %s39, 10
      %s47 = sphi 0, %s47
      %s49 = sphi 0, %s47
      %s50 = sphi 0, %s49
      %s64 = sphi 0, %s50
      %s72 = sphi 0, %s74
      %s75 = sphi 0, %s72
      %s76 = sphi 0, %s75
      %s92 = sphi 0, %s76
      %s100 = sphi 0, %s102
      %s103 = sphi 0, %s100
      %s104 = sphi 0, %s103
      %s120 = sphi 0, %s104
      %s128 = sphi 0, %s130
      %s131 = sphi 0, %s128
      %s132 = sphi 0, %s131
      %s148 = sphi 0, %s132
      %s152 = sphi 0, %s152
      %s154 = sphi 0, %s152
      %s155 = sphi 0, %s154
      %s169 = sphi 0, %s155
    $region4: #{_forward_impl.1} parent=1 // loop_header_branch
      %42 = sbr.rel (%p40) target = $region8
    $region5: #{_forward_impl.1} parent=1 // loop_body
      %s44 = ssub.s32 %s39, 1
      %s45 = ssub.s32 %s39, 2
      %s46 = sadd.s32 %s39, 1
      %s48 = sadd.s32 %s47, 1
      %p51 = scmp.eq.s32.totalorder %s39, 7
      %p52 = scmp.ne.s32.totalorder %s47, %s49
      %p53 = scmp.eq.s32.totalorder %s39, 0
      %p54 = por %p52, %p53
      %p55 = scmp.ne.s32.totalorder %s47, %s49
      %p56 = scmp.eq.s32.totalorder %s44, 7
      %p57 = por %p55, %p56
      %p58 = scmp.ne.s32.totalorder %s49, %s50
      %p59 = scmp.eq.s32.totalorder %s44, 0
      %p60 = por %p58, %p59
      %p61 = scmp.ne.s32.totalorder %s49, %s50
      %p62 = scmp.eq.s32.totalorder %s45, 7
      %p63 = por %p61, %p62
      %p65 = scmp.ne.s32.totalorder %s50, %s64
      %p66 = scmp.eq.s32.totalorder %s45, 0
      %p67 = por %p65, %p66
      %s68 = sld [smem:[#allocation8 + %s39]]
      %s69 = sld [smem:[#allocation8 + %s46]]
      %s70 = ssub.s32 %s68, %s69
      %p71 = scmp.eq.s32.totalorder %s70, 0
      %s73 = sadd.s32 %s72, 1
      %s74 = scalar_select %p71, %s72, %s73
      %p77 = pneg %p71
      %p78 = scmp.eq.s32.totalorder %s39, 7
      %p79 = por %p77, %p78
      %p80 = scmp.ne.s32.totalorder %s72, %s75
      %p81 = scmp.eq.s32.totalorder %s39, 0
      %p82 = por %p80, %p81
      %p83 = scmp.ne.s32.totalorder %s72, %s75
      %p84 = scmp.eq.s32.totalorder %s44, 7
      %p85 = por %p83, %p84
      %p86 = scmp.ne.s32.totalorder %s75, %s76
      %p87 = scmp.eq.s32.totalorder %s44, 0
      %p88 = por %p86, %p87
      %p89 = scmp.ne.s32.totalorder %s75, %s76
      %p90 = scmp.eq.s32.totalorder %s45, 7
      %p91 = por %p89, %p90
      %p93 = scmp.ne.s32.totalorder %s76, %s92
      %p94 = scmp.eq.s32.totalorder %s45, 0
      %p95 = por %p93, %p94
      %s96 = sld [smem:[#allocation4 + %s39]]
      %s97 = sld [smem:[#allocation4 + %s46]]
      %s98 = ssub.s32 %s96, %s97
      %p99 = scmp.eq.s32.totalorder %s98, 0
      %s101 = sadd.s32 %s100, 1
      %s102 = scalar_select %p99, %s100, %s101
      %p105 = pneg %p99
      %p106 = scmp.eq.s32.totalorder %s39, 7
      %p107 = por %p105, %p106
      %p108 = scmp.ne.s32.totalorder %s100, %s103
      %p109 = scmp.eq.s32.totalorder %s39, 0
      %p110 = por %p108, %p109
      %p111 = scmp.ne.s32.totalorder %s100, %s103
      %p112 = scmp.eq.s32.totalorder %s44, 7
      %p113 = por %p111, %p112
      %p114 = scmp.ne.s32.totalorder %s103, %s104
      %p115 = scmp.eq.s32.totalorder %s44, 0
      %p116 = por %p114, %p115
      %p117 = scmp.ne.s32.totalorder %s103, %s104
      %p118 = scmp.eq.s32.totalorder %s45, 7
      %p119 = por %p117, %p118
      %p121 = scmp.ne.s32.totalorder %s104, %s120
      %p122 = scmp.eq.s32.totalorder %s45, 0
      %p123 = por %p121, %p122
      %s124 = sld [smem:[#allocation5 + %s39]]
      %s125 = sld [smem:[#allocation5 + %s46]]
      %s126 = ssub.s32 %s124, %s125
      %p127 = scmp.eq.s32.totalorder %s126, 0
      %s129 = sadd.s32 %s128, 1
      %s130 = scalar_select %p127, %s128, %s129
      %p133 = pneg %p127
      %p134 = scmp.eq.s32.totalorder %s39, 7
      %p135 = por %p133, %p134
      %p136 = scmp.ne.s32.totalorder %s128, %s131
      %p137 = scmp.eq.s32.totalorder %s39, 0
      %p138 = por %p136, %p137
      %p139 = scmp.ne.s32.totalorder %s128, %s131
      %p140 = scmp.eq.s32.totalorder %s44, 7
      %p141 = por %p139, %p140
      %p142 = scmp.ne.s32.totalorder %s131, %s132
      %p143 = scmp.eq.s32.totalorder %s44, 0
      %p144 = por %p142, %p143
      %p145 = scmp.ne.s32.totalorder %s131, %s132
      %p146 = scmp.eq.s32.totalorder %s45, 7
      %p147 = por %p145, %p146
      %p149 = scmp.ne.s32.totalorder %s132, %s148
      %p150 = scmp.eq.s32.totalorder %s45, 0
      %p151 = por %p149, %p150
      %s153 = sadd.s32 %s152, 1
      %p156 = scmp.eq.s32.totalorder %s39, 7
      %p157 = scmp.ne.s32.totalorder %s152, %s154
      %p158 = scmp.eq.s32.totalorder %s39, 0
      %p159 = por %p157, %p158
      %p160 = scmp.ne.s32.totalorder %s152, %s154
      %p161 = scmp.eq.s32.totalorder %s44, 7
      %p162 = por %p160, %p161
      %p163 = scmp.ne.s32.totalorder %s154, %s155
      %p164 = scmp.eq.s32.totalorder %s44, 0
      %p165 = por %p163, %p164
      %p166 = scmp.ne.s32.totalorder %s154, %s155
      %p167 = scmp.eq.s32.totalorder %s45, 7
      %p168 = por %p166, %p167
      %p170 = scmp.ne.s32.totalorder %s155, %s169
      %p171 = scmp.eq.s32.totalorder %s45, 0
      %p172 = por %p170, %p171
      %p173 = scmp.le.s32.totalorder 1, %s39
      %p174 = scmp.lt.s32.totalorder %s39, 9
      %p175 = pnand %p173, %p174
      %p176 = pneg %p175
      // Predicated region
      $region9: #{_forward_impl.1} parent=5 // pred_check
        _
      $region10: #{_forward_impl.1} parent=5 // pred_check_branch
        %178 = sbr.rel (%p175) target = $region12
      $region11: #{_forward_impl.1} parent=5 // pred_region
        %s179 = ssub.s32 %s39, 1
        // Predicated region
        $region13: #{_forward_impl.1} parent=11 // pred_check
          %p180 = pneg %p60
        $region14: #{_forward_impl.1} parent=11 // pred_check_branch
          %182 = sbr.rel (%p180) target = $region16
        $region15: #{_forward_impl.1} parent=11 // pred_region
          %s184 = ssub.s32 16, 16
          %185 = vsyncadd [#allocation10], %s184
          %s187 = sshll.u32 %s5, 4
          %s188 = int_to_ptr.vmem [resolvable:$true] %s187
          %190 = dma.vmem_to_smem %s188, 16, [#allocation9], [#allocation10]
        $region16: #{_forward_impl.1} parent=11 // pred_fallthru
          _
      $region12: #{_forward_impl.1} parent=5 // pred_fallthru
        _
      %p191 = scmp.lt.s32.totalorder %s39, 8
      // Predicated region
      $region17: #{_forward_impl.1} parent=5 // pred_check
        %p192 = pneg %p191
      $region18: #{_forward_impl.1} parent=5 // pred_check_branch
        %194 = sbr.rel (%p192) target = $region20
      $region19: #{_forward_impl.1} parent=5 // pred_region
        // Predicated region
        $region21: #{_forward_impl.1} parent=19 // pred_check
          %p195 = pneg %p82
        $region22: #{_forward_impl.1} parent=19 // pred_check_branch
          %197 = sbr.rel (%p195) target = $region24
        $region23: #{_forward_impl.1} parent=19 // pred_region
          %s198 = sld [smem:[#allocation8 + %s39]]
          %p199 = scmp.lt.s32.totalorder %s198, 1
          %s200 = scalar_select %p199, %s198, 1
          %s201 = smul.addr %s200, 2
          %s202 = scalar_lea.vmem %s6, %s201
          %s203 = sld [smem:[#allocation8 + %s39]]
        $region24: #{_forward_impl.1} parent=19 // pred_fallthru
          _
        // Predicated region
        $region25: #{_forward_impl.1} parent=19 // pred_check
          %p204 = pneg %p110
        $region26: #{_forward_impl.1} parent=19 // pred_check_branch
          %206 = sbr.rel (%p204) target = $region28
        $region27: #{_forward_impl.1} parent=19 // pred_region
          %s207 = sld [smem:[#allocation4 + %s39]]
          %s208 = smul.u32 8, %s207
          %p209 = scmp.lt.s32.totalorder %s208, 31
          %s210 = scalar_select %p209, %s208, 31
          %s211 = smul.addr %s210, 2
          %s212 = smul.addr %s211, 8
          %s213 = scalar_lea.vmem %s7, %s212
          %s214 = sld [smem:[#allocation4 + %s39]]
          %s215 = smul.u32 8, %s214
        $region28: #{_forward_impl.1} parent=19 // pred_fallthru
          _
        // Predicated region
        $region29: #{_forward_impl.1} parent=19 // pred_check
          %p216 = pneg %p138
        $region30: #{_forward_impl.1} parent=19 // pred_check_branch
          %218 = sbr.rel (%p216) target = $region32
        $region31: #{_forward_impl.1} parent=19 // pred_region
          %s219 = sld [smem:[#allocation5 + %s39]]
          %s220 = smul.u32 8, %s219
          %p221 = scmp.lt.s32.totalorder %s220, 47
          %s222 = scalar_select %p221, %s220, 47
          %s223 = smul.addr %s222, 2
          %s224 = smul.addr %s223, 8
          %s225 = scalar_lea.vmem %s8, %s224
          %s226 = sld [smem:[#allocation5 + %s39]]
          %s227 = smul.u32 8, %s226
        $region32: #{_forward_impl.1} parent=19 // pred_fallthru
          _
      $region20: #{_forward_impl.1} parent=5 // pred_fallthru
        _
      %p228 = scmp.le.s32.totalorder 1, %s39
      %p229 = scmp.lt.s32.totalorder %s39, 9
      %p230 = pnand %p228, %p229
      %p231 = pneg %p230
      // Predicated region
      $region33: #{_forward_impl.1} parent=5 // pred_check
        _
      $region34: #{_forward_impl.1} parent=5 // pred_check_branch
        %233 = sbr.rel (%p230) target = $region36
      $region35: #{_forward_impl.1} parent=5 // pred_region
        %s234 = ssub.s32 %s39, 1
        // Predicated region
        $region37: #{_forward_impl.1} parent=35 // pred_check
          %p235 = pneg %p60
        $region38: #{_forward_impl.1} parent=35 // pred_check_branch
          %237 = sbr.rel (%p235) target = $region40
        $region39: #{_forward_impl.1} parent=35 // pred_region
          %238 = dma.done [#allocation10], 16
        $region40: #{_forward_impl.1} parent=35 // pred_fallthru
          _
        %239 = sfence
        %p240 = pneg %p60
        %p241 = pneg %p57
        %s242 = sld [smem:[#allocation8 + %s44]]
        %p243 = scmp.lt.s32.totalorder %s242, 1
        %s244 = scalar_select %p243, %s242, 1
        %s245 = smul.addr %s244, 2
        %s246 = scalar_lea.vmem %s6, %s245
        %p247 = pneg %p88
        %p248 = pneg %p85
        %s249 = sld [smem:[#allocation4 + %s44]]
        %s250 = smul.u32 8, %s249
        %p251 = scmp.lt.s32.totalorder %s250, 31
        %s252 = scalar_select %p251, %s250, 31
        %s253 = smul.addr %s252, 2
        %s254 = smul.addr %s253, 8
        %s255 = scalar_lea.vmem %s7, %s254
        %p256 = pneg %p116
        %p257 = pneg %p113
        %s258 = sld [smem:[#allocation5 + %s44]]
        %s259 = smul.u32 8, %s258
        %p260 = scmp.lt.s32.totalorder %s259, 47
        %s261 = scalar_select %p260, %s259, 47
        %s262 = smul.addr %s261, 2
        %s263 = smul.addr %s262, 8
        %s264 = scalar_lea.vmem %s8, %s263
        %p265 = pneg %p144
        %p266 = pneg %p141
        %p267 = pneg %p165
        %p268 = pneg %p162
        %s269 = sld [smem:[#allocation8 + %s44]]
        %p270 = scmp.lt.s32.totalorder %s269, 1
        %s271 = scalar_select %p270, %s269, 1
        %s272 = smul.addr %s271, 2
        %s273 = scalar_lea.vmem %s6, %s272
        %s274 = sld [smem:[#allocation8 + %s44]]
        %s275 = sld [smem:[#allocation4 + %s44]]
        %s276 = smul.u32 8, %s275
        %p277 = scmp.lt.s32.totalorder %s276, 31
        %s278 = scalar_select %p277, %s276, 31
        %s279 = smul.addr %s278, 2
        %s280 = smul.addr %s279, 8
        %s281 = scalar_lea.vmem %s7, %s280
        %s282 = sld [smem:[#allocation4 + %s44]]
        %s283 = smul.u32 8, %s282
        %s284 = sld [smem:[#allocation5 + %s44]]
        %s285 = smul.u32 8, %s284
        %p286 = scmp.lt.s32.totalorder %s285, 47
        %s287 = scalar_select %p286, %s285, 47
        %s288 = smul.addr %s287, 2
        %s289 = smul.addr %s288, 8
        %s290 = scalar_lea.vmem %s8, %s289
        %s291 = sld [smem:[#allocation5 + %s44]]
        %s292 = smul.u32 8, %s291
        %s293 = sld [smem:[#allocation9]]
        %s294 = sld [smem:[#allocation9 + $0x1]]
        %s295 = sld [smem:[#allocation7 + %s44]]
        %p296 = scmp.eq.s32.totalorder %s295, 1
        // Predicated region
        $region41: #{_forward_impl.1} parent=35 // pred_check
          %p297 = pneg %p296
        $region42: #{_forward_impl.1} parent=35 // pred_check_branch
          %299 = sbr.rel (%p297) target = $region44
        $region43: #{_forward_impl.1} parent=35 // pred_region
          %v300 = vld [vmem:[%s281] sm:$0xff]
          %v301 = vld [vmem:[%s281 + $0x8] sm:$0xff]
          %v302 = vld [vmem:[%s281 + $0x10] sm:$0xff]
          %v303 = vld [vmem:[%s281 + $0x18] sm:$0xff]
          %v304 = vld [vmem:[%s281 + $0x20] sm:$0xff]
          %v305 = vld [vmem:[%s281 + $0x28] sm:$0xff]
          %v306 = vld [vmem:[%s281 + $0x30] sm:$0xff]
          %v307 = vld [vmem:[%s281 + $0x38] sm:$0xff]
          %v308 = vld [vmem:[%s281 + $0x40] sm:$0xff]
          %v309 = vld [vmem:[%s281 + $0x48] sm:$0xff]
          %v310 = vld [vmem:[%s281 + $0x50] sm:$0xff]
          %v311 = vld [vmem:[%s281 + $0x58] sm:$0xff]
          %v312 = vld [vmem:[%s281 + $0x60] sm:$0xff]
          %v313 = vld [vmem:[%s281 + $0x68] sm:$0xff]
          %v314 = vld [vmem:[%s281 + $0x70] sm:$0xff]
          %v315 = vld [vmem:[%s281 + $0x78] sm:$0xff]
          %v316 = vld [vmem:[%s273] sm:$0x3]
          %v318 = vlaneseq
          %v319 = vshrl.u32 %v318, 7
          %v320 = vsub.s32 0, %v319
          %v321 = vrot.slane %v316, %v320
          %v322 = vlaneseq
          %v323 = vshrl.u32 %v322, 7
          %v324 = vsub.s32 1, %v323
          %v325 = vrot.slane %v316, %v324
          %v328 = vsub.f32 %v300, %v321
          %v329 = vsub.f32 %v301, %v325
          %v330 = vsub.f32 %v302, %v321
          %v331 = vsub.f32 %v303, %v325
          %v332 = vsub.f32 %v304, %v321
          %v333 = vsub.f32 %v305, %v325
          %v334 = vsub.f32 %v306, %v321
          %v335 = vsub.f32 %v307, %v325
          %v336 = vsub.f32 %v308, %v321
          %v337 = vsub.f32 %v309, %v325
          %v338 = vsub.f32 %v310, %v321
          %v339 = vsub.f32 %v311, %v325
          %v340 = vsub.f32 %v312, %v321
          %v341 = vsub.f32 %v313, %v325
          %v342 = vsub.f32 %v314, %v321
          %v343 = vsub.f32 %v315, %v325
          %v344 = vstv %s293
          %v345 = vmul.f32 %v328, %v344
          %v346 = vmul.f32 %v329, %v344
          %v347 = vmul.f32 %v330, %v344
          %v348 = vmul.f32 %v331, %v344
          %v349 = vmul.f32 %v332, %v344
          %v350 = vmul.f32 %v333, %v344
          %v351 = vmul.f32 %v334, %v344
          %v352 = vmul.f32 %v335, %v344
          %v353 = vmul.f32 %v336, %v344
          %v354 = vmul.f32 %v337, %v344
          %v355 = vmul.f32 %v338, %v344
          %v356 = vmul.f32 %v339, %v344
          %v357 = vmul.f32 %v340, %v344
          %v358 = vmul.f32 %v341, %v344
          %v359 = vmul.f32 %v342, %v344
          %v360 = vmul.f32 %v343, %v344
          %v361 = vmax.f32 %v345, %v346
          %362 = vmax.xlane.f32.xlu0 %v361
          %v363 = vpop.xlane.xlu0 %362
          %v364 = vmax.f32 %v347, %v348
          %365 = vmax.xlane.f32.xlu0 %v364
          %v366 = vpop.xlane.xlu0 %365
          %v367 = vmax.f32 %v349, %v350
          %368 = vmax.xlane.f32.xlu0 %v367
          %v369 = vpop.xlane.xlu0 %368
          %v370 = vmax.f32 %v351, %v352
          %371 = vmax.xlane.f32.xlu0 %v370
          %v372 = vpop.xlane.xlu0 %371
          %v373 = vmax.f32 %v353, %v354
          %374 = vmax.xlane.f32.xlu0 %v373
          %v375 = vpop.xlane.xlu0 %374
          %v376 = vmax.f32 %v355, %v356
          %377 = vmax.xlane.f32.xlu0 %v376
          %v378 = vpop.xlane.xlu0 %377
          %v379 = vmax.f32 %v357, %v358
          %380 = vmax.xlane.f32.xlu0 %v379
          %v381 = vpop.xlane.xlu0 %380
          %v382 = vmax.f32 %v359, %v360
          %383 = vmax.xlane.f32.xlu0 %v382
          %v384 = vpop.xlane.xlu0 %383
          %v385 = vsub.f32 %v345, %v363
          %v386 = vsub.f32 %v346, %v363
          %v387 = vsub.f32 %v347, %v366
          %v388 = vsub.f32 %v348, %v366
          %v389 = vsub.f32 %v349, %v369
          %v390 = vsub.f32 %v350, %v369
          %v391 = vsub.f32 %v351, %v372
          %v392 = vsub.f32 %v352, %v372
          %v393 = vsub.f32 %v353, %v375
          %v394 = vsub.f32 %v354, %v375
          %v395 = vsub.f32 %v355, %v378
          %v396 = vsub.f32 %v356, %v378
          %v397 = vsub.f32 %v357, %v381
          %v398 = vsub.f32 %v358, %v381
          %v399 = vsub.f32 %v359, %v384
          %v400 = vsub.f32 %v360, %v384
          %v401 = vmul.f32 %v385, 1.442695
          %v402 = vpow.pop %v401
          %v403 = vmul.f32 %v386, 1.442695
          %v404 = vpow.pop %v403
          %v405 = vmul.f32 %v387, 1.442695
          %v406 = vpow.pop %v405
          %v407 = vmul.f32 %v388, 1.442695
          %v408 = vpow.pop %v407
          %v409 = vmul.f32 %v389, 1.442695
          %v410 = vpow.pop %v409
          %v411 = vmul.f32 %v390, 1.442695
          %v412 = vpow.pop %v411
          %v413 = vmul.f32 %v391, 1.442695
          %v414 = vpow.pop %v413
          %v415 = vmul.f32 %v392, 1.442695
          %v416 = vpow.pop %v415
          %v417 = vmul.f32 %v393, 1.442695
          %v418 = vpow.pop %v417
          %v419 = vmul.f32 %v394, 1.442695
          %v420 = vpow.pop %v419
          %v421 = vmul.f32 %v395, 1.442695
          %v422 = vpow.pop %v421
          %v423 = vmul.f32 %v396, 1.442695
          %v424 = vpow.pop %v423
          %v425 = vmul.f32 %v397, 1.442695
          %v426 = vpow.pop %v425
          %v427 = vmul.f32 %v398, 1.442695
          %v428 = vpow.pop %v427
          %v429 = vmul.f32 %v399, 1.442695
          %v430 = vpow.pop %v429
          %v431 = vmul.f32 %v400, 1.442695
          %v432 = vpow.pop %v431
          %v433 = vadd.f32 %v402, %v404
          %434 = vadd.xlane.f32.xlu0 %v433
          %v435 = vpop.xlane.xlu0 %434
          %v436 = vadd.f32 %v406, %v408
          %437 = vadd.xlane.f32.xlu0 %v436
          %v438 = vpop.xlane.xlu0 %437
          %v439 = vadd.f32 %v410, %v412
          %440 = vadd.xlane.f32.xlu0 %v439
          %v441 = vpop.xlane.xlu0 %440
          %v442 = vadd.f32 %v414, %v416
          %443 = vadd.xlane.f32.xlu0 %v442
          %v444 = vpop.xlane.xlu0 %443
          %v445 = vadd.f32 %v418, %v420
          %446 = vadd.xlane.f32.xlu0 %v445
          %v447 = vpop.xlane.xlu0 %446
          %v448 = vadd.f32 %v422, %v424
          %449 = vadd.xlane.f32.xlu0 %v448
          %v450 = vpop.xlane.xlu0 %449
          %v451 = vadd.f32 %v426, %v428
          %452 = vadd.xlane.f32.xlu0 %v451
          %v453 = vpop.xlane.xlu0 %452
          %v454 = vadd.f32 %v430, %v432
          %455 = vadd.xlane.f32.xlu0 %v454
          %v456 = vpop.xlane.xlu0 %455
          %v457 = vrcp.pop %v435
          %v458 = vrcp.pop %v438
          %v459 = vrcp.pop %v441
          %v460 = vrcp.pop %v444
          %v461 = vrcp.pop %v447
          %v462 = vrcp.pop %v450
          %v463 = vrcp.pop %v453
          %v464 = vrcp.pop %v456
          %v465 = vmul.f32 %v402, %v457
          %v466 = vmul.f32 %v404, %v457
          %v467 = vmul.f32 %v406, %v458
          %v468 = vmul.f32 %v408, %v458
          %v469 = vmul.f32 %v410, %v459
          %v470 = vmul.f32 %v412, %v459
          %v471 = vmul.f32 %v414, %v460
          %v472 = vmul.f32 %v416, %v460
          %v473 = vmul.f32 %v418, %v461
          %v474 = vmul.f32 %v420, %v461
          %v475 = vmul.f32 %v422, %v462
          %v476 = vmul.f32 %v424, %v462
          %v477 = vmul.f32 %v426, %v463
          %v478 = vmul.f32 %v428, %v463
          %v479 = vmul.f32 %v430, %v464
          %v480 = vmul.f32 %v432, %v464
          %481 = vst [vmem:[#allocation2] sm:$0xff] %v465
          %482 = vst [vmem:[#allocation2 + $0x8] sm:$0xff] %v466
          %483 = vst [vmem:[#allocation2 + $0x10] sm:$0xff] %v467
          %484 = vst [vmem:[#allocation2 + $0x18] sm:$0xff] %v468
          %485 = vst [vmem:[#allocation2 + $0x20] sm:$0xff] %v469
          %486 = vst [vmem:[#allocation2 + $0x28] sm:$0xff] %v470
          %487 = vst [vmem:[#allocation2 + $0x30] sm:$0xff] %v471
          %488 = vst [vmem:[#allocation2 + $0x38] sm:$0xff] %v472
          %489 = vst [vmem:[#allocation2 + $0x40] sm:$0xff] %v473
          %490 = vst [vmem:[#allocation2 + $0x48] sm:$0xff] %v474
          %491 = vst [vmem:[#allocation2 + $0x50] sm:$0xff] %v475
          %492 = vst [vmem:[#allocation2 + $0x58] sm:$0xff] %v476
          %493 = vst [vmem:[#allocation2 + $0x60] sm:$0xff] %v477
          %494 = vst [vmem:[#allocation2 + $0x68] sm:$0xff] %v478
          %495 = vst [vmem:[#allocation2 + $0x70] sm:$0xff] %v479
          %496 = vst [vmem:[#allocation2 + $0x78] sm:$0xff] %v480
        $region44: #{_forward_impl.1} parent=35 // pred_fallthru
          _
        %v497 = vld [vmem:[%s290] sm:$0xff]
        %v498 = vld [vmem:[%s290 + $0x8] sm:$0xff]
        %v499 = vld [vmem:[%s290 + $0x10] sm:$0xff]
        %v500 = vld [vmem:[%s290 + $0x18] sm:$0xff]
        %v501 = vld [vmem:[%s290 + $0x20] sm:$0xff]
        %v502 = vld [vmem:[%s290 + $0x28] sm:$0xff]
        %v503 = vld [vmem:[%s290 + $0x30] sm:$0xff]
        %v504 = vld [vmem:[%s290 + $0x38] sm:$0xff]
        %v505 = vld [vmem:[%s290 + $0x40] sm:$0xff]
        %v506 = vld [vmem:[%s290 + $0x48] sm:$0xff]
        %v507 = vld [vmem:[%s290 + $0x50] sm:$0xff]
        %v508 = vld [vmem:[%s290 + $0x58] sm:$0xff]
        %v509 = vld [vmem:[%s290 + $0x60] sm:$0xff]
        %v510 = vld [vmem:[%s290 + $0x68] sm:$0xff]
        %v511 = vld [vmem:[%s290 + $0x70] sm:$0xff]
        %v512 = vld [vmem:[%s290 + $0x78] sm:$0xff]
        %v513 = vstv %s294
        %v514 = vmul.f32 %v497, %v513
        %v515 = vmul.f32 %v498, %v513
        %v516 = vmul.f32 %v499, %v513
        %v517 = vmul.f32 %v500, %v513
        %v518 = vmul.f32 %v501, %v513
        %v519 = vmul.f32 %v502, %v513
        %v520 = vmul.f32 %v503, %v513
        %v521 = vmul.f32 %v504, %v513
        %v522 = vmul.f32 %v505, %v513
        %v523 = vmul.f32 %v506, %v513
        %v524 = vmul.f32 %v507, %v513
        %v525 = vmul.f32 %v508, %v513
        %v526 = vmul.f32 %v509, %v513
        %v527 = vmul.f32 %v510, %v513
        %v528 = vmul.f32 %v511, %v513
        %v529 = vmul.f32 %v512, %v513
        %v530 = vmax.f32 %v514, %v515
        %531 = vmax.xlane.f32.xlu0 %v530
        %v532 = vpop.xlane.xlu0 %531
        %v533 = vmax.f32 %v516, %v517
        %534 = vmax.xlane.f32.xlu0 %v533
        %v535 = vpop.xlane.xlu0 %534
        %v536 = vmax.f32 %v518, %v519
        %537 = vmax.xlane.f32.xlu0 %v536
        %v538 = vpop.xlane.xlu0 %537
        %v539 = vmax.f32 %v520, %v521
        %540 = vmax.xlane.f32.xlu0 %v539
        %v541 = vpop.xlane.xlu0 %540
        %v542 = vmax.f32 %v522, %v523
        %543 = vmax.xlane.f32.xlu0 %v542
        %v544 = vpop.xlane.xlu0 %543
        %v545 = vmax.f32 %v524, %v525
        %546 = vmax.xlane.f32.xlu0 %v545
        %v547 = vpop.xlane.xlu0 %546
        %v548 = vmax.f32 %v526, %v527
        %549 = vmax.xlane.f32.xlu0 %v548
        %v550 = vpop.xlane.xlu0 %549
        %v551 = vmax.f32 %v528, %v529
        %552 = vmax.xlane.f32.xlu0 %v551
        %v553 = vpop.xlane.xlu0 %552
        %v554 = vsub.f32 %v514, %v532
        %v555 = vsub.f32 %v515, %v532
        %v556 = vsub.f32 %v516, %v535
        %v557 = vsub.f32 %v517, %v535
        %v558 = vsub.f32 %v518, %v538
        %v559 = vsub.f32 %v519, %v538
        %v560 = vsub.f32 %v520, %v541
        %v561 = vsub.f32 %v521, %v541
        %v562 = vsub.f32 %v522, %v544
        %v563 = vsub.f32 %v523, %v544
        %v564 = vsub.f32 %v524, %v547
        %v565 = vsub.f32 %v525, %v547
        %v566 = vsub.f32 %v526, %v550
        %v567 = vsub.f32 %v527, %v550
        %v568 = vsub.f32 %v528, %v553
        %v569 = vsub.f32 %v529, %v553
        %v570 = vmul.f32 %v554, 1.442695
        %v571 = vpow.pop %v570
        %v572 = vmul.f32 %v555, 1.442695
        %v573 = vpow.pop %v572
        %v574 = vmul.f32 %v556, 1.442695
        %v575 = vpow.pop %v574
        %v576 = vmul.f32 %v557, 1.442695
        %v577 = vpow.pop %v576
        %v578 = vmul.f32 %v558, 1.442695
        %v579 = vpow.pop %v578
        %v580 = vmul.f32 %v559, 1.442695
        %v581 = vpow.pop %v580
        %v582 = vmul.f32 %v560, 1.442695
        %v583 = vpow.pop %v582
        %v584 = vmul.f32 %v561, 1.442695
        %v585 = vpow.pop %v584
        %v586 = vmul.f32 %v562, 1.442695
        %v587 = vpow.pop %v586
        %v588 = vmul.f32 %v563, 1.442695
        %v589 = vpow.pop %v588
        %v590 = vmul.f32 %v564, 1.442695
        %v591 = vpow.pop %v590
        %v592 = vmul.f32 %v565, 1.442695
        %v593 = vpow.pop %v592
        %v594 = vmul.f32 %v566, 1.442695
        %v595 = vpow.pop %v594
        %v596 = vmul.f32 %v567, 1.442695
        %v597 = vpow.pop %v596
        %v598 = vmul.f32 %v568, 1.442695
        %v599 = vpow.pop %v598
        %v600 = vmul.f32 %v569, 1.442695
        %v601 = vpow.pop %v600
        %v602 = vadd.f32 %v571, %v573
        %603 = vadd.xlane.f32.xlu0 %v602
        %v604 = vpop.xlane.xlu0 %603
        %v605 = vadd.f32 %v575, %v577
        %606 = vadd.xlane.f32.xlu0 %v605
        %v607 = vpop.xlane.xlu0 %606
        %v608 = vadd.f32 %v579, %v581
        %609 = vadd.xlane.f32.xlu0 %v608
        %v610 = vpop.xlane.xlu0 %609
        %v611 = vadd.f32 %v583, %v585
        %612 = vadd.xlane.f32.xlu0 %v611
        %v613 = vpop.xlane.xlu0 %612
        %v614 = vadd.f32 %v587, %v589
        %615 = vadd.xlane.f32.xlu0 %v614
        %v616 = vpop.xlane.xlu0 %615
        %v617 = vadd.f32 %v591, %v593
        %618 = vadd.xlane.f32.xlu0 %v617
        %v619 = vpop.xlane.xlu0 %618
        %v620 = vadd.f32 %v595, %v597
        %621 = vadd.xlane.f32.xlu0 %v620
        %v622 = vpop.xlane.xlu0 %621
        %v623 = vadd.f32 %v599, %v601
        %624 = vadd.xlane.f32.xlu0 %v623
        %v625 = vpop.xlane.xlu0 %624
        %v626 = vlog2.pop %v604
        %v627 = vmul.f32 %v626, 0.6931472
        %v628 = vlog2.pop %v607
        %v629 = vmul.f32 %v628, 0.6931472
        %v630 = vlog2.pop %v610
        %v631 = vmul.f32 %v630, 0.6931472
        %v632 = vlog2.pop %v613
        %v633 = vmul.f32 %v632, 0.6931472
        %v634 = vlog2.pop %v616
        %v635 = vmul.f32 %v634, 0.6931472
        %v636 = vlog2.pop %v619
        %v637 = vmul.f32 %v636, 0.6931472
        %v638 = vlog2.pop %v622
        %v639 = vmul.f32 %v638, 0.6931472
        %v640 = vlog2.pop %v625
        %v641 = vmul.f32 %v640, 0.6931472
        %v642 = vld [vmem:[#allocation2] sm:$0xff]
        %v643 = vld [vmem:[#allocation2 + $0x8] sm:$0xff]
        %v644 = vld [vmem:[#allocation2 + $0x10] sm:$0xff]
        %v645 = vld [vmem:[#allocation2 + $0x18] sm:$0xff]
        %v646 = vld [vmem:[#allocation2 + $0x20] sm:$0xff]
        %v647 = vld [vmem:[#allocation2 + $0x28] sm:$0xff]
        %v648 = vld [vmem:[#allocation2 + $0x30] sm:$0xff]
        %v649 = vld [vmem:[#allocation2 + $0x38] sm:$0xff]
        %v650 = vld [vmem:[#allocation2 + $0x40] sm:$0xff]
        %v651 = vld [vmem:[#allocation2 + $0x48] sm:$0xff]
        %v652 = vld [vmem:[#allocation2 + $0x50] sm:$0xff]
        %v653 = vld [vmem:[#allocation2 + $0x58] sm:$0xff]
        %v654 = vld [vmem:[#allocation2 + $0x60] sm:$0xff]
        %v655 = vld [vmem:[#allocation2 + $0x68] sm:$0xff]
        %v656 = vld [vmem:[#allocation2 + $0x70] sm:$0xff]
        %v657 = vld [vmem:[#allocation2 + $0x78] sm:$0xff]
        %v658 = vmul.f32 %v642, %v554
        %v659 = vmul.f32 %v643, %v555
        %v660 = vmul.f32 %v644, %v556
        %v661 = vmul.f32 %v645, %v557
        %v662 = vmul.f32 %v646, %v558
        %v663 = vmul.f32 %v647, %v559
        %v664 = vmul.f32 %v648, %v560
        %v665 = vmul.f32 %v649, %v561
        %v666 = vmul.f32 %v650, %v562
        %v667 = vmul.f32 %v651, %v563
        %v668 = vmul.f32 %v652, %v564
        %v669 = vmul.f32 %v653, %v565
        %v670 = vmul.f32 %v654, %v566
        %v671 = vmul.f32 %v655, %v567
        %v672 = vmul.f32 %v656, %v568
        %v673 = vmul.f32 %v657, %v569
        %v674 = vadd.f32 %v658, %v659
        %675 = vadd.xlane.f32.xlu0 %v674
        %v676 = vpop.xlane.xlu0 %675
        %v677 = vadd.f32 %v660, %v661
        %678 = vadd.xlane.f32.xlu0 %v677
        %v679 = vpop.xlane.xlu0 %678
        %v680 = vadd.f32 %v662, %v663
        %681 = vadd.xlane.f32.xlu0 %v680
        %v682 = vpop.xlane.xlu0 %681
        %v683 = vadd.f32 %v664, %v665
        %684 = vadd.xlane.f32.xlu0 %v683
        %v685 = vpop.xlane.xlu0 %684
        %v686 = vadd.f32 %v666, %v667
        %687 = vadd.xlane.f32.xlu0 %v686
        %v688 = vpop.xlane.xlu0 %687
        %v689 = vadd.f32 %v668, %v669
        %690 = vadd.xlane.f32.xlu0 %v689
        %v691 = vpop.xlane.xlu0 %690
        %v692 = vadd.f32 %v670, %v671
        %693 = vadd.xlane.f32.xlu0 %v692
        %v694 = vpop.xlane.xlu0 %693
        %v695 = vadd.f32 %v672, %v673
        %696 = vadd.xlane.f32.xlu0 %v695
        %v697 = vpop.xlane.xlu0 %696
        %v698 = vsub.f32 %v627, %v676
        %v699 = vsub.f32 %v629, %v679
        %v700 = vsub.f32 %v631, %v682
        %v701 = vsub.f32 %v633, %v685
        %v702 = vsub.f32 %v635, %v688
        %v703 = vsub.f32 %v637, %v691
        %v704 = vsub.f32 %v639, %v694
        %v705 = vsub.f32 %v641, %v697
        %v706 = vlaneseq
        %v707 = vshrl.u32 %v706, 7
        %v708 = vadd.s32 %v707, 8
        %v709 = vadd.s32 %v707, 16
        %v710 = vadd.s32 %v707, 24
        %v711 = vadd.s32 %v707, 32
        %v712 = vadd.s32 %v707, 40
        %v713 = vadd.s32 %v707, 48
        %v714 = vadd.s32 %v707, 56
        %s715 = sld [smem:[#allocation6 + %s44]]
        %v716 = vstv %s715
        %vm717 = vcmp.lt.s32.totalorder %v707, %v716
        %vm718 = vcmp.lt.s32.totalorder %v708, %v716
        %vm719 = vcmp.lt.s32.totalorder %v709, %v716
        %vm720 = vcmp.lt.s32.totalorder %v710, %v716
        %vm721 = vcmp.lt.s32.totalorder %v711, %v716
        %vm722 = vcmp.lt.s32.totalorder %v712, %v716
        %vm723 = vcmp.lt.s32.totalorder %v713, %v716
        %vm724 = vcmp.lt.s32.totalorder %v714, %v716
        %v725 = vsel %vm717, %v698, 0.0
        %v726 = vsel %vm718, %v699, 0.0
        %v727 = vsel %vm719, %v700, 0.0
        %v728 = vsel %vm720, %v701, 0.0
        %v729 = vsel %vm721, %v702, 0.0
        %v730 = vsel %vm722, %v703, 0.0
        %v731 = vsel %vm723, %v704, 0.0
        %v732 = vsel %vm724, %v705, 0.0
        %vm733 = vcmask 7168
        %v734 = vsel %vm733, %v725, 0.0
        %v735 = vsel %vm733, %v726, 0.0
        %v736 = vadd.f32 %v734, %v735
        %v737 = vsel %vm733, %v727, 0.0
        %v738 = vadd.f32 %v736, %v737
        %v739 = vsel %vm733, %v728, 0.0
        %v740 = vadd.f32 %v738, %v739
        %v741 = vsel %vm733, %v729, 0.0
        %v742 = vadd.f32 %v740, %v741
        %v743 = vsel %vm733, %v730, 0.0
        %v744 = vadd.f32 %v742, %v743
        %v745 = vsel %vm733, %v731, 0.0
        %v746 = vadd.f32 %v744, %v745
        %v747 = vsel %vm733, %v732, 0.0
        %v748 = vadd.f32 %v746, %v747
        %749 = vadd.xlane.f32.xlu0 %v748
        %v750 = vpop.xlane.xlu0 %749
        %v751 = vrot.slane %v750, 4
        %v752 = vadd.f32 %v750, %v751
        %v753 = vrot.slane %v752, 2
        %v754 = vadd.f32 %v752, %v753
        %v755 = vrot.slane %v754, 1
        %v756 = vadd.f32 %v754, %v755
        %s757 = vtos %v756
        %s758 = scalar_lea.smem [#allocation12], %s44
        %759 = sst [smem:[%s758]] %s757
        // Predicated region
        $region45: #{_forward_impl.1} parent=35 // pred_check
          %p760 = pneg %p162
        $region46: #{_forward_impl.1} parent=35 // pred_check_branch
          %762 = sbr.rel (%p760) target = $region48
        $region47: #{_forward_impl.1} parent=35 // pred_region
          %s764 = ssub.s32 16, 16
          %765 = vsyncadd [#allocation11], %s764
          %s767 = sshll.u32 %s9, 4
          %s768 = int_to_ptr.vmem [resolvable:$true] %s767
          %770 = dma.smem_to_vmem [#allocation12], 16, %s768, [#allocation11]
        $region48: #{_forward_impl.1} parent=35 // pred_fallthru
          _
        // Predicated region
        $region49: #{_forward_impl.1} parent=35 // pred_check
          %p771 = pneg %p162
        $region50: #{_forward_impl.1} parent=35 // pred_check_branch
          %773 = sbr.rel (%p771) target = $region52
        $region51: #{_forward_impl.1} parent=35 // pred_region
          %774 = dma.done [#allocation11], 16
        $region52: #{_forward_impl.1} parent=35 // pred_fallthru
          _
        %775 = sfence
      $region36: #{_forward_impl.1} parent=5 // pred_fallthru
        _
      %p776 = scmp.le.s32.totalorder 2, %s39
      // Predicated region
      $region53: #{_forward_impl.1} parent=5 // pred_check
        %p777 = pneg %p776
      $region54: #{_forward_impl.1} parent=5 // pred_check_branch
        %779 = sbr.rel (%p777) target = $region56
      $region55: #{_forward_impl.1} parent=5 // pred_region
        %s780 = ssub.s32 %s39, 2
      $region56: #{_forward_impl.1} parent=5 // pred_fallthru
        _
    $region6: #{_forward_impl.1} parent=1 // loop_footer
      %s43 = sadd.s32 1, %s39
    $region7: #{_forward_impl.1} parent=1 // loop_footer_branch
      %38 = sbr.rel target = $region3
    $region8: #{_forward_impl.1} parent=1 // loop_exit
      _
    %781 = vsyncpa [#allocation10], 1
    %s782 = scalar_lea.sflag [#allocation10], 1
    %783 = vsyncpa %s782, 1
    %784 = vsyncpa [#allocation11], 1
    %s785 = scalar_lea.sflag [#allocation11], 1
    %786 = vsyncpa %s785, 1

</llo_original>
